<compile_context>
chip_gen: v6e
topology: v6e:2x2x1
jax: 0.10.0
libtpu: 0.0.40
codegen_flags: <defaults>
</compile_context>

<pallas_src>
import functools

import jax
import jax.numpy as jnp
from jax.experimental import pallas as pl
from jax.experimental.pallas import tpu as pltpu


# ---------------------------------------------------------------------------
# Kernels
# ---------------------------------------------------------------------------
def _expand_rows_kernel(x_ref, e_ref, o_ref):
    """Regime A: x_ref (TM, g*W) @ e_ref (g*W, g*s*s*W) -> o_ref (TM, g*s*s*W)."""
    x = x_ref[...]
    if x.dtype != e_ref.dtype:
        x = x.astype(e_ref.dtype)
    y = jnp.dot(x, e_ref[...], preferred_element_type=jnp.float32)
    o_ref[...] = y.astype(o_ref.dtype)


def _expand_chunk_kernel(x_ref, e_ref, o_ref, *, s, w, wc, ragged):
    """Regime B: width-expand one 128-wide chunk, store the s height copies.

    x_ref: (TM, wc); e_ref: (wc, s*wc) resident; o_ref: (TM, s, s*wc).
    """
    x = x_ref[...]
    if ragged:
        # Tail W-chunk: zero out-of-bounds columns so uninitialized VMEM (which
        # may read as NaN) cannot pollute valid outputs through 0*NaN.
        k = pl.program_id(1)
        col = jax.lax.broadcasted_iota(jnp.int32, x.shape, 1)
        x = jnp.where(col < (w - k * wc), x, jnp.zeros_like(x))
    if x.dtype != e_ref.dtype:
        x = x.astype(e_ref.dtype)
    y = jnp.dot(x, e_ref[...], preferred_element_type=jnp.float32).astype(o_ref.dtype)
    for a in range(s):                     # s is small and static
        o_ref[:, a, :] = y


# ---------------------------------------------------------------------------
# Tiling helpers
# ---------------------------------------------------------------------------
def _round_up(v, m):
    return ((v + m - 1) // m) * m


def _pick_block_rows(n_rows, in_row_bytes, out_row_bytes, out_row_pad_bytes,
                     resident_bytes, sublane,
                     target_out_bytes=6 << 20, vmem_budget=36 << 20):
    """Rows per grid step: ~6 MiB output blocks under a VMEM budget that also
    accounts for the resident expansion matrix (both pipeline buffers)."""
    per_row = 2 * (in_row_bytes + out_row_pad_bytes)        # double-buffered in+out
    avail = max(vmem_budget - resident_bytes, per_row)
    cap = min(max(1, target_out_bytes // max(out_row_bytes, 1)),
              max(1, avail // per_row))
    # Guarantee >= 2 grid steps along rows when possible (v7x has 2 TensorCores).
    if n_rows > sublane:
        cap = min(cap, _round_up(-(-n_rows // 2), sublane))
    if cap >= n_rows:
        return n_rows                                       # full dim always legal
    cap = max(sublane, (int(cap) // sublane) * sublane)     # dtype sublane packing
    t = cap
    for _ in range(64):                                     # prefer exact divisor
        if n_rows % t == 0:
            return t
        t -= sublane
        if t < sublane:
            break
    return cap


def _vmem_limit_bytes(est_bytes):
    # Enough for the chosen blocks + headroom; capped so it stays comfortably
    # inside v7x's 64 MiB physical VMEM (v5e/v6e have 128 MiB).
    return int(min(max(est_bytes + (8 << 20), 32 << 20), 48 << 20))


# ---------------------------------------------------------------------------
# Wrapper
# ---------------------------------------------------------------------------
def _upsample_nchw(x4, scale_factor, *, block_rows=None):
    """x4: (N, C, H, W) -> (N, C, H*s, W*s), nearest-neighbor, integer s."""
    s = int(scale_factor)
    assert s == scale_factor and s >= 1, "integer scale_factor required"
    N, C, H, W = x4.shape
    if s == 1:
        return x4                                   # pure no-op: skip the kernel
    sH, sW = H * s, W * s
    R = N * C * H                                   # flat input-row count

    xdt = jnp.dtype(x4.dtype)
    itemsize = xdt.itemsize
    sublane = 8 * max(1, 4 // itemsize)             # 8 (f32) / 16 (bf16) / 32 (i8)

    if xdt in (jnp.dtype(jnp.float32), jnp.dtype(jnp.bfloat16)):
        e_dtype = xdt                               # native 0/1 E -> exact copy
    else:
        # TODO(synk): int32/int64 values with |x| >= 2^24 do not round-trip the
        # f32 MXU path exactly; int8/16 and float16 are exact.
        e_dtype = jnp.dtype(jnp.float32)
    e_item = jnp.dtype(e_dtype).itemsize

    if W <= 128:
        # ----- Regime A: whole-row expansion (contraction g*W <= 128) ---------
        # Pack g rows per kernel row until the output reaches ~128 lanes.
        g, g_cap = 1, max(1, 128 // W)
        for cand in range(1, g_cap + 1):
            if R % cand == 0:
                g = cand
                if cand * s * s * W >= 128:
                    break
        Rg, Win, Wout = R // g, g * W, g * s * s * W

        # E_base[w, j] = 1 iff (j mod sW) // s == w : width expand, with the s
        # replicated output rows concatenated along lanes; block-diag over g.
        j = jnp.arange(s * s * W, dtype=jnp.int32)
        src = (j % sW) // s
        e_base = (src[None, :] == jnp.arange(W, dtype=jnp.int32)[:, None]).astype(e_dtype)
        e = jnp.kron(jnp.eye(g, dtype=e_dtype), e_base)          # (Win, Wout)

        e_bytes = 2 * Win * Wout * e_item                        # both pipeline bufs
        in_row, out_row = Win * itemsize, Wout * itemsize
        if block_rows is None:
            tm = _pick_block_rows(Rg, in_row, out_row, out_row, e_bytes, sublane)
        else:
            tm = min(int(block_rows), Rg)
        grid = (pl.cdiv(Rg, tm),)
        est = e_bytes + 2 * tm * (in_row + out_row) + tm * Wout * 4

        out2 = pl.pallas_call(
            _expand_rows_kernel,
            out_shape=jax.ShapeDtypeStruct((Rg, Wout), x4.dtype),
            grid=grid,
            in_specs=[
                pl.BlockSpec((tm, Win), lambda i: (i, 0)),
                pl.BlockSpec((Win, Wout), lambda i: (0, 0)),     # resident E
            ],
            out_specs=pl.BlockSpec((tm, Wout), lambda i: (i, 0)),
            compiler_params=pltpu.CompilerParams(
                dimension_semantics=("parallel",),
                vmem_limit_bytes=_vmem_limit_bytes(est)),
            cost_estimate=pl.CostEstimate(
                flops=2 * Rg * Win * Wout,
                transcendentals=0,
                bytes_accessed=(1 + s * s) * R * W * itemsize + Win * Wout * e_item),
        )(x4.reshape(Rg, Win), e)
        # Flat (Rg, g*s*s*W) row-major == (N, C, sH, sW) row-major -> free reshape.
        return out2.reshape(N, C, sH, sW)

    # ----- Regime B: W > 128 -> cap the contraction at 128-wide W chunks ------
    Wc = 128
    nK = pl.cdiv(W, Wc)
    ragged = (W % Wc) != 0
    sWc = s * Wc

    j = jnp.arange(sWc, dtype=jnp.int32)
    e = (j[None, :] // s ==
         jnp.arange(Wc, dtype=jnp.int32)[:, None]).astype(e_dtype)   # (Wc, s*Wc)

    e_bytes = 2 * Wc * sWc * e_item                  # <= ~256 KiB (f32, s=2)
    in_row = Wc * itemsize
    out_row = s * sWc * itemsize                     # useful bytes/row/chunk
    out_row_pad = max(s, 8) * sWc * itemsize         # conservative sublane padding
    if block_rows is None:
        tm = _pick_block_rows(R, in_row, out_row, out_row_pad, e_bytes, sublane)
    else:
        tm = min(int(block_rows), R)
    grid = (pl.cdiv(R, tm), nK)
    est = e_bytes + 2 * tm * (in_row + out_row_pad) + tm * sWc * 4

    kernel = functools.partial(_expand_chunk_kernel, s=s, w=W, wc=Wc, ragged=ragged)
    out3 = pl.pallas_call(
        kernel,
        out_shape=jax.ShapeDtypeStruct((R, s, sW), x4.dtype),
        grid=grid,
        in_specs=[
            pl.BlockSpec((tm, Wc), lambda i, k: (i, k)),
            pl.BlockSpec((Wc, sWc), lambda i, k: (0, 0)),        # resident E
        ],
        out_specs=pl.BlockSpec((tm, s, sWc), lambda i, k: (i, 0, k)),
        compiler_params=pltpu.CompilerParams(
            dimension_semantics=("parallel", "parallel"),
            vmem_limit_bytes=_vmem_limit_bytes(est)),
        cost_estimate=pl.CostEstimate(
            flops=2 * R * s * sW * Wc,
            transcendentals=0,
            bytes_accessed=(1 + s * s) * R * W * itemsize + Wc * sWc * e_item),
    )(x4.reshape(R, W), e)
    # (R, s, sW) row-major == (N, C, sH, sW) row-major -> free reshape.
    return out3.reshape(N, C, sH, sW)


def upsampling_forward(x, scale_factor=2, mode="nearest"):
    """Mirrors Upsampling.forward: unsqueeze to 4-D if needed, upsample, squeeze."""
    assert mode == "nearest", "only mode='nearest' implemented"
    # TODO(synk): bilinear/bicubic interpolation modes are not implemented (nearest only).
    d = x.ndim
    assert d in (3, 4), "expected a 3-D or 4-D input (as the reference module uses)"
    if 4 - d:                          # 3-D input -> unsqueeze at dim 1 (like torch)
        x = jnp.expand_dims(x, 1)
    y = _upsample_nchw(x, scale_factor)
    if 4 - d:                          # torch .squeeze_() removes all size-1 dims
        y = jnp.squeeze(y)
    return y


def _reference_nearest(x4, s):
    return jnp.repeat(jnp.repeat(x4, s, axis=-2), s, axis=-1)


if __name__ == "__main__":
    key = jax.random.PRNGKey(0)
    x = jax.random.normal(key, (2, 4, 16, 16), dtype=jnp.float32)

    out = jax.block_until_ready(upsampling_forward(x, scale_factor=2, mode="nearest"))
    ref = _reference_nearest(x, 2)
    assert out.shape == (2, 4, 32, 32), out.shape
    assert jnp.allclose(out, ref, rtol=2e-5, atol=1e-6), "f32 mismatch vs reference"

    # bf16 path: native-dtype E, bit-exact (0/1 selection, f32 accumulation).
    xb = x.astype(jnp.bfloat16)
    outb = jax.block_until_ready(upsampling_forward(xb, 2, "nearest"))
    assert outb.dtype == jnp.bfloat16
    assert jnp.array_equal(outb, _reference_nearest(xb, 2)), "bf16 mismatch"

    # Multi-step grid with forced small row blocks (Rg=48, block_rows=8).
    x2 = jax.random.normal(jax.random.PRNGKey(2), (2, 3, 16, 16), dtype=jnp.float32)
    out2 = jax.block_until_ready(_upsample_nchw(x2, 2, block_rows=8))
    assert jnp.allclose(out2, _reference_nearest(x2, 2), rtol=2e-5, atol=1e-6), \
        "tiled-grid mismatch"

    # Regime B (W > 128): chunked contraction with a ragged tail chunk.
    x3 = jax.random.normal(jax.random.PRNGKey(3), (1, 2, 4, 160), dtype=jnp.float32)
    out3 = jax.block_until_ready(_upsample_nchw(x3, 2))
    assert out3.shape == (1, 2, 8, 320), out3.shape
    assert jnp.allclose(out3, _reference_nearest(x3, 2), rtol=2e-5, atol=1e-6), \
        "regime-B mismatch"

    # 3-D (unsqueeze/squeeze) path of forward().
    x5 = jax.random.normal(jax.random.PRNGKey(1), (2, 16, 16), dtype=jnp.float32)
    out5 = jax.block_until_ready(upsampling_forward(x5, 2, "nearest"))
    ref5 = jnp.squeeze(_reference_nearest(x5[:, None], 2))
    assert out5.shape == (2, 32, 32), out5.shape
    assert jnp.allclose(out5, ref5, rtol=2e-5, atol=1e-6), "3-D path mismatch"

    # scale_factor == 1 is a pure no-op (early return, no kernel launch).
    out6 = jax.block_until_ready(upsampling_forward(x5, 1, "nearest"))
    assert out6.shape == x5.shape and jnp.array_equal(out6, x5), "s=1 path mismatch"

    print("KERNEL_OK")
</pallas_src>

<mosaic_0001>
module attributes {stable_mosaic.version = 11 : i64} {
  func.func @_expand_rows_kernel(%arg0: i32, %arg1: memref<32x32xf32, #tpu.memory_space<vmem>>, %arg2: memref<32x128xf32, #tpu.memory_space<vmem>>, %arg3: memref<32x128xf32, #tpu.memory_space<vmem>>) attributes {dimension_semantics = [#tpu.dimension_semantics<parallel>], iteration_bounds = array<i64: 2>, scalar_prefetch = 0 : i64, scratch_operands = 0 : i64, tpu.core_type = #tpu.core_type<tc>, window_params = [{transform_indices = @transform_0, window_bounds = array<i64: 32, 32>}, {pipeline_mode = #tpu.pipeline_mode<synchronous>, transform_indices = @transform_1, window_bounds = array<i64: 32, 128>}, {transform_indices = @transform_2, window_bounds = array<i64: 32, 128>}]} {
    %c0 = arith.constant 0 : index
    %c0_0 = arith.constant 0 : index
    %0 = vector.load %arg1[%c0, %c0_0] : memref<32x32xf32, #tpu.memory_space<vmem>>, vector<32x32xf32>
    %c0_1 = arith.constant 0 : index
    %c0_2 = arith.constant 0 : index
    %1 = vector.load %arg2[%c0_1, %c0_2] : memref<32x128xf32, #tpu.memory_space<vmem>>, vector<32x128xf32>
    %cst = arith.constant dense<0.000000e+00> : vector<32x128xf32>
    %2 = tpu.matmul %0, %1, %cst {dimension_numbers = #tpu.dot_dimension_numbers<[1], [0], [0], [1], [0, 0, 1, 1], [], []>} : vector<32x32xf32>, vector<32x128xf32>, vector<32x128xf32> -> vector<32x128xf32>
    %c0_3 = arith.constant 0 : index
    %c0_4 = arith.constant 0 : index
    %3 = vector.load %arg3[%c0_3, %c0_4] : memref<32x128xf32, #tpu.memory_space<vmem>>, vector<32x128xf32>
    tpu.vector_store %arg3[%c0_3, %c0_4], %2 {strides = array<i32>} : memref<32x128xf32, #tpu.memory_space<vmem>>, vector<32x128xf32>,
    return
  }
  func.func @transform_0(%arg0: i32) -> (i32, i32) {
    %c0_i32 = arith.constant 0 : i32
    %c0_i32_0 = arith.constant 0 : i32
    return %arg0, %c0_i32 : i32, i32
  }
  func.func @transform_1(%arg0: i32) -> (i32, i32) {
    %c0_i32 = arith.constant 0 : i32
    %c0_i32_0 = arith.constant 0 : i32
    %c0_i32_1 = arith.constant 0 : i32
    return %c0_i32, %c0_i32_0 : i32, i32
  }
  func.func @transform_2(%arg0: i32) -> (i32, i32) {
    %c0_i32 = arith.constant 0 : i32
    %c0_i32_0 = arith.constant 0 : i32
    return %arg0, %c0_i32 : i32, i32
  }
}

</mosaic_0001>

<llo_original>
// kernel: tpu_custom_call.1
$region0: #{tpu_custom_call.1}
  #allocation0 [shape = 'u32[]', space=smem, size = 0x4, offset = 0x4, fixed_abs, tag = 'smem constant byte address 0x4 - core index']
  #allocation1 [shape = 'u32[144,128]{1,0:T(1,128)}', space=vmem, size = 0x12000, scoped, tag = 'internal scratch']
  %s0 = inlined_call_operand.vmem [shape: f32[64,32], index: 0, kind: input, shape index: {}]
  %s1 = inlined_call_operand.vmem [shape: f32[32,128], index: 1, kind: input, shape index: {}]
  %s2 = inlined_call_operand.hbm [shape: f32[64,128], index: 2, kind: output, shape index: {}]
  %s3 = sld [smem:[#allocation0]]
  $region41: #{tpu_custom_call.1} parent=0
    _
  %s5 = ssub.s32 1, %s3
  %s6 = scalar_select 0, %s5, %s3
  $region1: #{tpu_custom_call.1} parent=0
    #allocation2 [shape = 'u8[32768]{0}', space=vmem, size = 0x8000, scoped, tag = 'output window, operand 0']
    #allocation3 [shape = 's32[2]{0}', space=sflag, size = 0x8, scoped, tag = 'scoped memory for tpu_custom_call.1']
    %7 = vsyncpa [#allocation3], 0
    %s8 = scalar_lea.sflag [#allocation3], 1
    %9 = vsyncpa %s8, 0
    loop: start=0, step=1, limit=4
    $region2: #{tpu_custom_call.1} parent=1 // loop_pre_header
      _
    $region3: #{tpu_custom_call.1} parent=1 // loop_header
      %s11 = sphi 0, %s15
      %p12 = scmp.ge.s32.totalorder %s11, 4
      %s21 = sphi 0, %s23
      %s24 = sphi 0, %s21
      %s25 = sphi 0, %s24
      %s41 = sphi 0, %s25
      %s45 = sphi 0, %s45
      %s47 = sphi 0, %s45
      %s48 = sphi 0, %s47
      %s62 = sphi 0, %s48
      %s68 = sphi 0, %s70
      %s71 = sphi 0, %s68
      %s72 = sphi 0, %s71
      %s88 = sphi 0, %s72
    $region4: #{tpu_custom_call.1} parent=1 // loop_header_branch
      %14 = sbr.rel (%p12) target = $region8
    $region5: #{tpu_custom_call.1} parent=1 // loop_body
      %s16 = ssub.s32 %s11, 1
      %s17 = ssub.s32 %s11, 2
      %s18 = sadd.s32 %s11, 1
      %s19 = ssub.s32 %s11, %s18
      %p20 = scmp.eq.s32.totalorder %s19, 0
      %s22 = sadd.s32 %s21, 1
      %s23 = scalar_select %p20, %s21, %s22
      %p26 = pneg %p20
      %p27 = scmp.eq.s32.totalorder %s11, 1
      %p28 = por %p26, %p27
      %p29 = scmp.ne.s32.totalorder %s21, %s24
      %p30 = scmp.eq.s32.totalorder %s11, 0
      %p31 = por %p29, %p30
      %p32 = scmp.ne.s32.totalorder %s21, %s24
      %p33 = scmp.eq.s32.totalorder %s16, 1
      %p34 = por %p32, %p33
      %p35 = scmp.ne.s32.totalorder %s24, %s25
      %p36 = scmp.eq.s32.totalorder %s16, 0
      %p37 = por %p35, %p36
      %p38 = scmp.ne.s32.totalorder %s24, %s25
      %p39 = scmp.eq.s32.totalorder %s17, 1
      %p40 = por %p38, %p39
      %p42 = scmp.ne.s32.totalorder %s25, %s41
      %p43 = scmp.eq.s32.totalorder %s17, 0
      %p44 = por %p42, %p43
      %s46 = sadd.s32 %s45, 1
      %p49 = scmp.eq.s32.totalorder %s11, 1
      %p50 = scmp.ne.s32.totalorder %s45, %s47
      %p51 = scmp.eq.s32.totalorder %s11, 0
      %p52 = por %p50, %p51
      %p53 = scmp.ne.s32.totalorder %s45, %s47
      %p54 = scmp.eq.s32.totalorder %s16, 1
      %p55 = por %p53, %p54
      %p56 = scmp.ne.s32.totalorder %s47, %s48
      %p57 = scmp.eq.s32.totalorder %s16, 0
      %p58 = por %p56, %p57
      %p59 = scmp.ne.s32.totalorder %s47, %s48
      %p60 = scmp.eq.s32.totalorder %s17, 1
      %p61 = por %p59, %p60
      %p63 = scmp.ne.s32.totalorder %s48, %s62
      %p64 = scmp.eq.s32.totalorder %s17, 0
      %p65 = por %p63, %p64
      %s66 = ssub.s32 %s11, %s18
      %p67 = scmp.eq.s32.totalorder %s66, 0
      %s69 = sadd.s32 %s68, 1
      %s70 = scalar_select %p67, %s68, %s69
      %p73 = pneg %p67
      %p74 = scmp.eq.s32.totalorder %s11, 1
      %p75 = por %p73, %p74
      %p76 = scmp.ne.s32.totalorder %s68, %s71
      %p77 = scmp.eq.s32.totalorder %s11, 0
      %p78 = por %p76, %p77
      %p79 = scmp.ne.s32.totalorder %s68, %s71
      %p80 = scmp.eq.s32.totalorder %s16, 1
      %p81 = por %p79, %p80
      %p82 = scmp.ne.s32.totalorder %s71, %s72
      %p83 = scmp.eq.s32.totalorder %s16, 0
      %p84 = por %p82, %p83
      %p85 = scmp.ne.s32.totalorder %s71, %s72
      %p86 = scmp.eq.s32.totalorder %s17, 1
      %p87 = por %p85, %p86
      %p89 = scmp.ne.s32.totalorder %s72, %s88
      %p90 = scmp.eq.s32.totalorder %s17, 0
      %p91 = por %p89, %p90
      %p92 = scmp.le.s32.totalorder 1, %s11
      %p93 = scmp.lt.s32.totalorder %s11, 3
      %p94 = pnand %p92, %p93
      %p95 = pneg %p94
      // Predicated region
      $region9: #{tpu_custom_call.1} parent=5 // pred_check
        _
      $region10: #{tpu_custom_call.1} parent=5 // pred_check_branch
        %97 = sbr.rel (%p94) target = $region12
      $region11: #{tpu_custom_call.1} parent=5 // pred_region
        %s98 = ssub.s32 %s11, 1
        // Predicated region
        $region13: #{tpu_custom_call.1} parent=11 // pred_check
          %p99 = pneg %p58
        $region14: #{tpu_custom_call.1} parent=11 // pred_check_branch
          %101 = sbr.rel (%p99) target = $region16
        $region15: #{tpu_custom_call.1} parent=11 // pred_region
          _
        $region16: #{tpu_custom_call.1} parent=11 // pred_fallthru
          _
      $region12: #{tpu_custom_call.1} parent=5 // pred_fallthru
        _
      %p102 = scmp.lt.s32.totalorder %s11, 2
      // Predicated region
      $region17: #{tpu_custom_call.1} parent=5 // pred_check
        %p103 = pneg %p102
      $region18: #{tpu_custom_call.1} parent=5 // pred_check_branch
        %105 = sbr.rel (%p103) target = $region20
      $region19: #{tpu_custom_call.1} parent=5 // pred_region
        // Predicated region
        $region21: #{tpu_custom_call.1} parent=19 // pred_check
          %p106 = pneg %p31
        $region22: #{tpu_custom_call.1} parent=19 // pred_check_branch
          %108 = sbr.rel (%p106) target = $region24
        $region23: #{tpu_custom_call.1} parent=19 // pred_region
          %s109 = smul.u32 4, %s11
          %p110 = scmp.lt.s32.totalorder %s109, 7
          %s111 = scalar_select %p110, %s109, 7
          %s112 = smul.addr %s111, 8
          %s113 = scalar_lea.vmem %s0, %s112
          %s114 = smul.u32 4, %s11
        $region24: #{tpu_custom_call.1} parent=19 // pred_fallthru
          _
      $region20: #{tpu_custom_call.1} parent=5 // pred_fallthru
        _
      %p115 = scmp.le.s32.totalorder 1, %s11
      %p116 = scmp.lt.s32.totalorder %s11, 3
      %p117 = pnand %p115, %p116
      %p118 = pneg %p117
      // Predicated region
      $region25: #{tpu_custom_call.1} parent=5 // pred_check
        _
      $region26: #{tpu_custom_call.1} parent=5 // pred_check_branch
        %120 = sbr.rel (%p117) target = $region28
      $region27: #{tpu_custom_call.1} parent=5 // pred_region
        %s121 = ssub.s32 %s11, 1
        %s122 = smul.u32 4, %s16
        %p123 = scmp.lt.s32.totalorder %s122, 7
        %s124 = scalar_select %p123, %s122, 7
        %s125 = smul.addr %s124, 8
        %s126 = scalar_lea.vmem %s0, %s125
        %p127 = pneg %p37
        %p128 = pneg %p34
        %p129 = pneg %p58
        %p130 = pneg %p55
        %p131 = pneg %p84
        %p132 = pneg %p81
        %s133 = sand.u32 %s71, 1
        %s134 = scalar_lea.sflag [#allocation3], %s133
        %s135 = sand.u32 %s71, 1
        %s136 = smul.addr %s135, 32
        %s137 = scalar_lea.vmem [#allocation2], %s136
        %s138 = smul.u32 4, %s16
        %p139 = scmp.lt.s32.totalorder %s138, 7
        %s140 = scalar_select %p139, %s138, 7
        %s141 = smul.addr %s140, 8
        %s142 = scalar_lea.vmem %s0, %s141
        %s143 = smul.u32 4, %s16
        %s144 = smul.u32 4, %s16
        %v145 = vld [vmem:[%s142] sm:$0xff]
        %v146 = vld [vmem:[%s142 + $0x8] sm:$0xff]
        %v147 = vld [vmem:[%s142 + $0x10] sm:$0xff]
        %v148 = vld [vmem:[%s142 + $0x18] sm:$0xff]
        %v149 = vld [vmem:[%s1] sm:$0xff]
        %v150 = vld [vmem:[%s1 + $0x8] sm:$0xff]
        %v151 = vld [vmem:[%s1 + $0x10] sm:$0xff]
        %v152 = vld [vmem:[%s1 + $0x18] sm:$0xff]
        %vm153 = vcmask 261120
        %v155 = vsel %vm153, %v145, 0
        %v158 = vsel %vm153, %v146, 0
        %v161 = vsel %vm153, %v147, 0
        %v164 = vsel %vm153, %v148, 0
        %166 = vmatprep.subr.mxu0 0.0
        %167 = vmatpush1.msra.mxu0 0.0
        %168 = vmatprep.subr.mxu0 0.0
        %169 = vmatpush1.msra.mxu0 0.0
        %170 = vmatprep.subr.mxu0 0.0
        %171 = vmatpush1.msra.mxu0 0.0
        %172 = vmatprep.subr.mxu0 0.0
        %173 = vmatpush1.msra.mxu0 0.0
        %174 = vmatprep.subr.mxu0 0.0
        %175 = vmatpush1.msra.mxu0 0.0
        %176 = vmatprep.subr.mxu0 0.0
        %177 = vmatpush1.msra.mxu0 0.0
        %178 = vmatprep.subr.mxu0 0.0
        %179 = vmatpush1.msra.mxu0 0.0
        %180 = vmatprep.subr.mxu0 0.0
        %181 = vmatpush1.msra.mxu0 0.0
        %182 = vmatprep.subr.mxu0 0.0
        %183 = vmatpush1.msra.mxu0 0.0
        %184 = vmatprep.subr.mxu0 0.0
        %185 = vmatpush1.msra.mxu0 0.0
        %186 = vmatprep.subr.mxu0 0.0
        %187 = vmatpush1.msra.mxu0 0.0
        %188 = vmatprep.subr.mxu0 0.0
        %189 = vmatpush1.msra.mxu0 0.0
        %190 = vmatprep.subr.mxu0 0.0
        %191 = vmatpush1.msra.mxu0 %v152
        %192 = vmatprep.subr.mxu0 0.0
        %193 = vmatpush1.msra.mxu0 %v151
        %194 = vmatprep.subr.mxu0 0.0
        %195 = vmatpush1.msra.mxu0 %v150
        %196 = vmatprep.subr.mxu0 0.0
        %197 = vmatpush1.msra.mxu0 %v149
        %198 = vmatprep.subr.mxu0 0.0
        %199 = vmatpush2.msra.mxu0 0.0
        %200 = vmatprep.subr.mxu0 0.0
        %201 = vmatpush2.msra.mxu0 0.0
        %202 = vmatprep.subr.mxu0 0.0
        %203 = vmatpush2.msra.mxu0 0.0
        %204 = vmatprep.subr.mxu0 0.0
        %205 = vmatpush2.msra.mxu0 0.0
        %206 = vmatprep.subr.mxu0 0.0
        %207 = vmatpush2.msra.mxu0 0.0
        %208 = vmatprep.subr.mxu0 0.0
        %209 = vmatpush2.msra.mxu0 0.0
        %210 = vmatprep.subr.mxu0 0.0
        %211 = vmatpush2.msra.mxu0 0.0
        %212 = vmatprep.subr.mxu0 0.0
        %213 = vmatpush2.msra.mxu0 0.0
        %214 = vmatprep.subr.mxu0 0.0
        %215 = vmatpush2.msra.mxu0 0.0
        %216 = vmatprep.subr.mxu0 0.0
        %217 = vmatpush2.msra.mxu0 0.0
        %218 = vmatprep.subr.mxu0 0.0
        %219 = vmatpush2.msra.mxu0 0.0
        %220 = vmatprep.subr.mxu0 0.0
        %221 = vmatpush2.msra.mxu0 0.0
        %222 = vmatprep.subr.mxu0 0.0
        %223 = vmatpush2.msra.mxu0 0.0
        %224 = vmatprep.subr.mxu0 0.0
        %225 = vmatpush2.msra.mxu0 0.0
        %226 = vmatprep.subr.mxu0 0.0
        %227 = vmatpush2.msra.mxu0 0.0
        %228 = vmatprep.subr.mxu0 0.0
        %229 = vmatpush2.msra.mxu0 0.0
        %230 = vmatprep.mubr.f32.mxu0 0.0
        %231 = vmatmul.mubr.f32.gmra.mxu0 %v155
        %v232 = vpop.f32.mrf.mxu0
        %v233 = vadd.f32 0.0, %v232
        %v234 = vpop.f32.mrf.mxu0
        %235 = vmatprep.mubr.f32.mxu0 0.0
        %236 = vmatmul.mubr.f32.gmra.mxu0 %v158
        %v237 = vpop.f32.mrf.mxu0
        %v238 = vadd.f32 0.0, %v237
        %v239 = vpop.f32.mrf.mxu0
        %240 = vmatprep.mubr.f32.mxu0 0.0
        %241 = vmatmul.mubr.f32.gmra.mxu0 %v161
        %v242 = vpop.f32.mrf.mxu0
        %v243 = vadd.f32 0.0, %v242
        %v244 = vpop.f32.mrf.mxu0
        %245 = vmatprep.mubr.f32.mxu0 0.0
        %246 = vmatmul.mubr.f32.gmra.mxu0 %v164
        %v247 = vpop.f32.mrf.mxu0
        %v248 = vadd.f32 0.0, %v247
        %v249 = vpop.f32.mrf.mxu0
        %250 = vdwg.mxu0
        %251 = vst [vmem:[%s137] sm:$0xff] %v233
        %252 = vst [vmem:[%s137 + $0x8] sm:$0xff] %v238
        %253 = vst [vmem:[%s137 + $0x10] sm:$0xff] %v243
        %254 = vst [vmem:[%s137 + $0x18] sm:$0xff] %v248
        %s255 = sand.u32 %s71, 1
        %s256 = scalar_lea.sflag [#allocation3], %s255
        %s257 = sand.u32 %s71, 1
        %s258 = smul.addr %s257, 32
        %s259 = scalar_lea.vmem [#allocation2], %s258
        // Predicated region
        $region29: #{tpu_custom_call.1} parent=27 // pred_check
          %p260 = pneg %p81
        $region30: #{tpu_custom_call.1} parent=27 // pred_check_branch
          %262 = sbr.rel (%p260) target = $region32
        $region31: #{tpu_custom_call.1} parent=27 // pred_region
          %s263 = smul.u32 4, %s16
          %s265 = ssub.s32 512, 512
          %266 = vsyncadd %s256, %s265
          %s267 = smul.addr %s263, 128
          %s268 = scalar_lea.hbm %s2, %s267
          %s269 = sshll.u32 %s259, 4
          %s270 = int_to_ptr.vmem [resolvable:$true] %s269
          %275 = dma.vmem_to_hbm [thread:$0]  %s270, 512, %s268, %s256, 128, 128, 8
        $region32: #{tpu_custom_call.1} parent=27 // pred_fallthru
          _
      $region28: #{tpu_custom_call.1} parent=5 // pred_fallthru
        _
      %p276 = scmp.le.s32.totalorder 2, %s11
      // Predicated region
      $region33: #{tpu_custom_call.1} parent=5 // pred_check
        %p277 = pneg %p276
      $region34: #{tpu_custom_call.1} parent=5 // pred_check_branch
        %279 = sbr.rel (%p277) target = $region36
      $region35: #{tpu_custom_call.1} parent=5 // pred_region
        %s280 = ssub.s32 %s11, 2
        // Predicated region
        $region37: #{tpu_custom_call.1} parent=35 // pred_check
          %p281 = pneg %p87
        $region38: #{tpu_custom_call.1} parent=35 // pred_check_branch
          %283 = sbr.rel (%p281) target = $region40
        $region39: #{tpu_custom_call.1} parent=35 // pred_region
          %s284 = sand.u32 %s72, 1
          %s285 = scalar_lea.sflag [#allocation3], %s284
          %s286 = sand.u32 %s72, 1
          %s287 = smul.addr %s286, 32
          %s288 = scalar_lea.vmem [#allocation2], %s287
          %289 = dma.done %s285, 512
        $region40: #{tpu_custom_call.1} parent=35 // pred_fallthru
          _
      $region36: #{tpu_custom_call.1} parent=5 // pred_fallthru
        _
    $region6: #{tpu_custom_call.1} parent=1 // loop_footer
      %s15 = sadd.s32 1, %s11
    $region7: #{tpu_custom_call.1} parent=1 // loop_footer_branch
      %10 = sbr.rel target = $region3
    $region8: #{tpu_custom_call.1} parent=1 // loop_exit
      _
    %290 = vsyncpa [#allocation3], 1
    %s291 = scalar_lea.sflag [#allocation3], 1
    %292 = vsyncpa %s291, 1

</llo_original>
